<compile_context>
chip_gen: v6e
topology: v6e:2x2x1
jax: 0.10.0
libtpu: 0.0.40
codegen_flags: <defaults>
</compile_context>

<pallas_src>
import functools

import jax
import jax.numpy as jnp
from jax.experimental import pallas as pl
from jax.experimental.pallas import tpu as pltpu


def _round_up(x, m):
    return ((x + m - 1) // m) * m


# ---------------------------------------------------------------------------
# One-time chip / capability introspection (cached).
# ---------------------------------------------------------------------------

@functools.cache
def _device_kind():
    try:
        return jax.devices()[0].device_kind.lower()
    except Exception:
        return ""


@functools.cache
def _vmem_capacity_bytes():
    try:
        return int(pltpu.get_tpu_info().vmem_capacity_bytes)
    except Exception:
        kind = _device_kind()
        if "v7" in kind or "7x" in kind:
            return 64 << 20
        return 128 << 20


@functools.cache
def _mxu_lanes():
    # 256-wide MXU on v6e / v7x; 128 on v5e and older generations.
    kind = _device_kind()
    for old in ("v2", "v3", "v4", "v5"):
        if old in kind:
            return 128
    return 256


@functools.cache
def _single_buffering_supported():
    """Capability probe for pl.Buffered(1) (single-buffered resident weights).

    Probed ONCE with a tiny dedicated copy kernel (value-checked), so genuine
    failures in the encoder kernel itself are never swallowed by this check.
    """
    if not hasattr(pl, "Buffered"):
        return False

    def _copy(x_ref, o_ref):
        o_ref[...] = x_ref[...]

    try:
        spec = pl.BlockSpec((8, 128), lambda i: (0, 0),
                            pipeline_mode=pl.Buffered(1))
        x = jnp.arange(8 * 128, dtype=jnp.float32).reshape(8, 128)
        out = pl.pallas_call(
            _copy,
            out_shape=jax.ShapeDtypeStruct((8, 128), jnp.float32),
            grid=(1,),
            in_specs=[spec],
            out_specs=pl.BlockSpec((8, 128), lambda i: (0, 0)),
        )(x)
        jax.block_until_ready(out)
        return bool(jnp.allclose(out, x))
    except Exception:
        return False


# ---------------------------------------------------------------------------
# Kernel
# ---------------------------------------------------------------------------

def _encoder_kernel(x_ref, w1_ref, b1_ref, w2_ref, b2_ref, o_ref, h_ref):
    # x_ref : (tmp, kp)    input dtype (cast to compute dtype here, in-kernel)
    # w1_ref: (kp, np_)    compute dtype (block-diagonal when lane packing)
    # b1_ref: (1, np_)     f32
    # w2_ref: (np_, tn)    compute dtype (column tile j of w2)
    # b2_ref: (1, tn)      f32
    # o_ref : (tmp, tn)    output dtype
    # h_ref : (tmp, np_)   compute-dtype VMEM scratch, persists across j
    @pl.when(pl.program_id(1) == 0)
    def _():
        x = x_ref[...].astype(w1_ref.dtype)
        h = jnp.dot(x, w1_ref[...], preferred_element_type=jnp.float32)
        h = jnp.maximum(h + b1_ref[...], 0.0)        # bias + ReLU in f32 (VPU)
        h_ref[...] = h.astype(h_ref.dtype)           # cast just before 2nd MXU pass

    out = jnp.dot(h_ref[...], w2_ref[...], preferred_element_type=jnp.float32)
    o_ref[...] = (out + b2_ref[...]).astype(o_ref.dtype)


# ---------------------------------------------------------------------------
# One-time parameter preparation (cache the result; reuse for every forward)
# ---------------------------------------------------------------------------

def encoder_init(w1, b1, w2, b2, *, compute_dtype=jnp.bfloat16, lanes=None):
    """w1: (input_size, hidden), w2: (hidden, hidden) -- (in, out) layout,
    i.e. the transpose of torch's nn.Linear weight."""
    input_size, hidden = w1.shape
    assert w2.shape == (hidden, hidden)
    assert b1.shape == (hidden,) and b2.shape == (hidden,)
    if lanes is None:
        lanes = _mxu_lanes()

    # Lane packing: fold p rows into one lane-dense row when hidden is small.
    # Pad hidden so the packed width is a multiple of 128 (lane-dense stores).
    if hidden < lanes:
        hidden_p = pl.next_power_of_2(hidden)
        p = lanes // hidden_p
    else:
        hidden_p = _round_up(hidden, 128)
        p = 1

    kp = p * input_size
    np_ = p * hidden_p
    ph = hidden_p - hidden

    w1c = jnp.pad(w1.astype(compute_dtype), ((0, 0), (0, ph)))
    w2c = jnp.pad(w2.astype(compute_dtype), ((0, ph), (0, ph)))
    b1c = jnp.pad(b1.astype(jnp.float32), (0, ph))
    b2c = jnp.pad(b2.astype(jnp.float32), (0, ph))

    if p > 1:
        eye = jnp.eye(p, dtype=compute_dtype)
        w1p = jnp.kron(eye, w1c)                 # (p*input_size, p*hidden_p)
        w2p = jnp.kron(eye, w2c)                 # (p*hidden_p,   p*hidden_p)
        b1p = jnp.tile(b1c, p)
        b2p = jnp.tile(b2c, p)
    else:
        w1p, w2p, b1p, b2p = w1c, w2c, b1c, b2c

    return {
        "w1": w1p, "b1": b1p.reshape(1, np_),
        "w2": w2p, "b2": b2p.reshape(1, np_),
        "config": {
            "input_size": input_size, "hidden": hidden, "hidden_p": hidden_p,
            "p": p, "kp": kp, "np": np_, "compute_dtype": compute_dtype,
        },
    }


# ---------------------------------------------------------------------------
# Forward
# ---------------------------------------------------------------------------

def encoder_apply(params, x):
    cfg = params["config"]
    input_size, hidden = cfg["input_size"], cfg["hidden"]
    hidden_p, p, kp, np_ = cfg["hidden_p"], cfg["p"], cfg["kp"], cfg["np"]
    compute_dtype = cfg["compute_dtype"]
    w1p, b1p, w2p, b2p = params["w1"], params["b1"], params["w2"], params["b2"]

    orig_shape = x.shape
    assert orig_shape[-1] == input_size
    out_dtype = x.dtype

    x2d = x.reshape(-1, input_size)
    M = x2d.shape[0]

    # Pad rows only up to a multiple of p (needed for the packing reshape); the
    # grid handles a partial last row-tile on its own.
    Mp = _round_up(M, p)
    if Mp != M:
        x2d = jnp.pad(x2d, ((0, Mp - M), (0, 0)))
    mp = Mp // p
    xp = x2d.reshape(mp, kp)          # contiguous reshape; cast happens in-kernel

    # ---- row-tile sizing ---------------------------------------------------
    # Bound the f32 hidden intermediate (tmp x np_) and guarantee >= 2 grid
    # steps for moderate inputs (v7x megacore).
    h_budget = 4 << 20
    tmp_cap = max(8, (h_budget // (np_ * 4)) // 8 * 8)
    tmp_target = min(1024 if p > 1 else 512, tmp_cap)
    if mp < 8:
        tmp = mp                               # block dim == full array dim
    elif mp <= 16:
        tmp = _round_up(mp, 8)
    else:
        tmp = min(tmp_target, _round_up(pl.cdiv(mp, 2), 8))
    grid_m = pl.cdiv(mp, tmp)

    # ---- column tiling of the second matmul for large hidden ---------------
    cd_bytes = jnp.dtype(compute_dtype).itemsize
    vmem_cap = _vmem_capacity_bytes()
    w2_bytes = np_ * np_ * cd_bytes
    if w2_bytes <= vmem_cap // 4:
        tn = np_                               # w2 fully resident in VMEM
    else:
        tn = 512 if np_ % 512 == 0 else (256 if np_ % 256 == 0 else 128)
    grid_n = np_ // tn
    # TODO(synk): for extreme hidden sizes (w2 column tile + h scratch no longer
    # fitting), add K-tiling of the second matmul with an f32 VMEM accumulator.

    single_buf = _single_buffering_supported()

    def resident(cond):
        return dict(pipeline_mode=pl.Buffered(1)) if (single_buf and cond) else {}

    in_specs = [
        pl.BlockSpec((tmp, kp), lambda i, j: (i, 0)),
        pl.BlockSpec((kp, np_), lambda i, j: (0, 0), **resident(True)),
        pl.BlockSpec((1, np_), lambda i, j: (0, 0), **resident(True)),
        pl.BlockSpec((np_, tn), lambda i, j: (0, j), **resident(grid_n == 1)),
        pl.BlockSpec((1, tn), lambda i, j: (0, j), **resident(grid_n == 1)),
    ]
    out_spec = pl.BlockSpec((tmp, tn), lambda i, j: (i, j))

    # Explicit VMEM budget: weights (conservatively x2 in case single-buffering
    # is unavailable) + double-buffered x/out tiles + h scratch + headroom.
    weights_bytes = (w1p.size + w2p.size) * cd_bytes + (b1p.size + b2p.size) * 4
    est = (2 * weights_bytes
           + 2 * tmp * kp * x.dtype.itemsize
           + 2 * tmp * tn * jnp.dtype(out_dtype).itemsize
           + tmp * np_ * cd_bytes
           + (4 << 20))
    vmem_limit = int(min(vmem_cap - (4 << 20), max(32 << 20, est)))

    out = pl.pallas_call(
        _encoder_kernel,
        out_shape=jax.ShapeDtypeStruct((mp, np_), out_dtype),
        grid_spec=pltpu.PrefetchScalarGridSpec(
            num_scalar_prefetch=0,
            grid=(grid_m, grid_n),
            in_specs=in_specs,
            out_specs=out_spec,
            scratch_shapes=[pltpu.VMEM((tmp, np_), compute_dtype)],
        ),
        compiler_params=pltpu.CompilerParams(
            dimension_semantics=("parallel", "arbitrary"),
            vmem_limit_bytes=vmem_limit,
        ),
    )(xp, w1p, b1p, w2p, b2p)

    out = out.reshape(Mp, hidden_p)            # unpack lanes (contiguous reshape)
    if hidden_p != hidden:
        out = out[:, :hidden]
    if Mp != M:
        out = out[:M]
    return out.reshape(*orig_shape[:-1], hidden)


def encoder_forward(x, w1, b1, w2, b2, *, compute_dtype=jnp.bfloat16):
    # Convenience wrapper; for repeated calls prefer encoder_init + encoder_apply.
    return encoder_apply(
        encoder_init(w1, b1, w2, b2, compute_dtype=compute_dtype), x)


if __name__ == "__main__":
    # Small shapes consistent with the module: batch=2, seq=8, input_size=4, hidden=32
    batch, seq, input_size, hidden = 2, 8, 4, 32

    key = jax.random.PRNGKey(0)
    kx, kw1, kb1, kw2, kb2 = jax.random.split(key, 5)

    x = jax.random.normal(kx, (batch, seq, input_size), dtype=jnp.float32)

    # PyTorch Linear stores weight as (out, in); we keep the (in, out) layout.
    w1 = jax.random.normal(kw1, (input_size, hidden), dtype=jnp.float32) * 0.1
    b1 = jax.random.normal(kb1, (hidden,), dtype=jnp.float32) * 0.1
    w2 = jax.random.normal(kw2, (hidden, hidden), dtype=jnp.float32) * 0.1
    b2 = jax.random.normal(kb2, (hidden,), dtype=jnp.float32) * 0.1

    ref_f32 = jnp.maximum(x @ w1 + b1, 0.0) @ w2 + b2

    # 1) exact-path check: f32 MXU operands vs. plain-JAX f32 reference.
    params_f32 = encoder_init(w1, b1, w2, b2, compute_dtype=jnp.float32)
    out_f32 = jax.block_until_ready(encoder_apply(params_f32, x))
    assert out_f32.shape == (batch, seq, hidden)
    assert jnp.allclose(out_f32, ref_f32, atol=1e-4, rtol=1e-4)

    # 2) default fast path: bf16 MXU operands, f32 accumulation / bias / ReLU.
    params_bf16 = encoder_init(w1, b1, w2, b2)     # prepared once, reusable
    out_bf16 = jax.block_until_ready(encoder_apply(params_bf16, x))
    assert out_bf16.shape == (batch, seq, hidden)
    assert jnp.allclose(out_bf16, ref_f32, atol=3e-2, rtol=3e-2)

    print("KERNEL_OK")
</pallas_src>

<mosaic_0001>
module attributes {stable_mosaic.version = 11 : i64} {
  func.func @_copy(%arg0: i32, %arg1: memref<8x128xf32, #tpu.memory_space<vmem>>, %arg2: memref<8x128xf32, #tpu.memory_space<vmem>>) attributes {dimension_semantics = [#tpu.dimension_semantics<arbitrary>], iteration_bounds = array<i64: 1>, scalar_prefetch = 0 : i64, scratch_operands = 0 : i64, tpu.core_type = #tpu.core_type<tc>, window_params = [{pipeline_mode = #tpu.pipeline_mode<synchronous>, transform_indices = @transform_0, window_bounds = array<i64: 8, 128>}, {pipeline_mode = #tpu.pipeline_mode<synchronous>, transform_indices = @transform_1, window_bounds = array<i64: 8, 128>}]} {
    %c0 = arith.constant 0 : index
    %c0_0 = arith.constant 0 : index
    %0 = vector.load %arg1[%c0, %c0_0] : memref<8x128xf32, #tpu.memory_space<vmem>>, vector<8x128xf32>
    %c0_1 = arith.constant 0 : index
    %c0_2 = arith.constant 0 : index
    %1 = vector.load %arg2[%c0_1, %c0_2] : memref<8x128xf32, #tpu.memory_space<vmem>>, vector<8x128xf32>
    tpu.vector_store %arg2[%c0_1, %c0_2], %0 {strides = array<i32>} : memref<8x128xf32, #tpu.memory_space<vmem>>, vector<8x128xf32>,
    return
  }
  func.func @transform_0(%arg0: i32) -> (i32, i32) {
    %c0_i32 = arith.constant 0 : i32
    %c0_i32_0 = arith.constant 0 : i32
    %c0_i32_1 = arith.constant 0 : i32
    return %c0_i32, %c0_i32_0 : i32, i32
  }
  func.func @transform_1(%arg0: i32) -> (i32, i32) {
    %c0_i32 = arith.constant 0 : i32
    %c0_i32_0 = arith.constant 0 : i32
    %c0_i32_1 = arith.constant 0 : i32
    return %c0_i32, %c0_i32_0 : i32, i32
  }
}

module attributes {stable_mosaic.version = 11 : i64} {
  func.func @_encoder_kernel(%arg0: i32, %arg1: i32, %arg2: memref<2x32xf32, #tpu.memory_space<vmem>>, %arg3: memref<32x256xf32, #tpu.memory_space<vmem>>, %arg4: memref<1x256xf32, #tpu.memory_space<vmem>>, %arg5: memref<256x256xf32, #tpu.memory_space<vmem>>, %arg6: memref<1x256xf32, #tpu.memory_space<vmem>>, %arg7: memref<2x256xf32, #tpu.memory_space<vmem>>, %arg8: memref<2x256xf32, #tpu.memory_space<vmem>>) attributes {dimension_semantics = [#tpu.dimension_semantics<parallel>, #tpu.dimension_semantics<arbitrary>], iteration_bounds = array<i64: 1, 1>, scalar_prefetch = 0 : i64, scratch_operands = 1 : i64, tpu.core_type = #tpu.core_type<tc>, window_params = [{transform_indices = @transform_0, window_bounds = array<i64: 2, 32>}, {pipeline_mode = #tpu.pipeline_mode<synchronous>, transform_indices = @transform_1, window_bounds = array<i64: 32, 256>}, {pipeline_mode = #tpu.pipeline_mode<synchronous>, transform_indices = @transform_2, window_bounds = array<i64: 1, 256>}, {transform_indices = @transform_3, window_bounds = array<i64: 256, 256>}, {transform_indices = @transform_4, window_bounds = array<i64: 1, 256>}, {transform_indices = @transform_5, window_bounds = array<i64: 2, 256>}]} {
    %c0_i32 = arith.constant 0 : i32
    %0 = arith.cmpi eq, %arg1, %c0_i32 : i32
    %1 = arith.extui %0 : i1 to i32
    %c0_i32_0 = arith.constant 0 : i32
    %2 = arith.cmpi ne, %1, %c0_i32_0 : i32
    scf.if %2 {
      %c0_8 = arith.constant 0 : index
      %c0_9 = arith.constant 0 : index
      %10 = vector.load %arg2[%c0_8, %c0_9] : memref<2x32xf32, #tpu.memory_space<vmem>>, vector<2x32xf32>
      %c0_10 = arith.constant 0 : index
      %c0_11 = arith.constant 0 : index
      %11 = vector.load %arg3[%c0_10, %c0_11] : memref<32x256xf32, #tpu.memory_space<vmem>>, vector<32x256xf32>
      %cst_12 = arith.constant dense<0.000000e+00> : vector<2x256xf32>
      %12 = tpu.matmul %10, %11, %cst_12 {dimension_numbers = #tpu.dot_dimension_numbers<[1], [0], [0], [1], [0, 0, 1, 1], [], []>} : vector<2x32xf32>, vector<32x256xf32>, vector<2x256xf32> -> vector<2x256xf32>
      %c0_13 = arith.constant 0 : index
      %c0_14 = arith.constant 0 : index
      %13 = vector.load %arg4[%c0_13, %c0_14] : memref<1x256xf32, #tpu.memory_space<vmem>>, vector<1x256xf32>
      %14 = vector.broadcast %13 : vector<1x256xf32> to vector<2x256xf32>
      %15 = arith.addf %12, %14 : vector<2x256xf32>
      %cst_15 = arith.constant 0.000000e+00 : f32
      %16 = vector.broadcast %cst_15 : f32 to vector<2x256xf32>
      %17 = arith.maximumf %15, %16 : vector<2x256xf32>
      %c0_16 = arith.constant 0 : index
      %c0_17 = arith.constant 0 : index
      %18 = vector.load %arg8[%c0_16, %c0_17] : memref<2x256xf32, #tpu.memory_space<vmem>>, vector<2x256xf32>
      tpu.vector_store %arg8[%c0_16, %c0_17], %17 {strides = array<i32>} : memref<2x256xf32, #tpu.memory_space<vmem>>, vector<2x256xf32>,
    } else {
    }
    %c0 = arith.constant 0 : index
    %c0_1 = arith.constant 0 : index
    %3 = vector.load %arg8[%c0, %c0_1] : memref<2x256xf32, #tpu.memory_space<vmem>>, vector<2x256xf32>
    %c0_2 = arith.constant 0 : index
    %c0_3 = arith.constant 0 : index
    %4 = vector.load %arg5[%c0_2, %c0_3] : memref<256x256xf32, #tpu.memory_space<vmem>>, vector<256x256xf32>
    %cst = arith.constant dense<0.000000e+00> : vector<2x256xf32>
    %5 = tpu.matmul %3, %4, %cst {dimension_numbers = #tpu.dot_dimension_numbers<[1], [0], [0], [1], [0, 0, 1, 1], [], []>} : vector<2x256xf32>, vector<256x256xf32>, vector<2x256xf32> -> vector<2x256xf32>
    %c0_4 = arith.constant 0 : index
    %c0_5 = arith.constant 0 : index
    %6 = vector.load %arg6[%c0_4, %c0_5] : memref<1x256xf32, #tpu.memory_space<vmem>>, vector<1x256xf32>
    %7 = vector.broadcast %6 : vector<1x256xf32> to vector<2x256xf32>
    %8 = arith.addf %5, %7 : vector<2x256xf32>
    %c0_6 = arith.constant 0 : index
    %c0_7 = arith.constant 0 : index
    %9 = vector.load %arg7[%c0_6, %c0_7] : memref<2x256xf32, #tpu.memory_space<vmem>>, vector<2x256xf32>
    tpu.vector_store %arg7[%c0_6, %c0_7], %8 {strides = array<i32>} : memref<2x256xf32, #tpu.memory_space<vmem>>, vector<2x256xf32>,
    return
  }
  func.func @transform_0(%arg0: i32, %arg1: i32) -> (i32, i32) {
    %c0_i32 = arith.constant 0 : i32
    %c0_i32_0 = arith.constant 0 : i32
    return %arg0, %c0_i32 : i32, i32
  }
  func.func @transform_1(%arg0: i32, %arg1: i32) -> (i32, i32) {
    %c0_i32 = arith.constant 0 : i32
    %c0_i32_0 = arith.constant 0 : i32
    %c0_i32_1 = arith.constant 0 : i32
    return %c0_i32, %c0_i32_0 : i32, i32
  }
  func.func @transform_2(%arg0: i32, %arg1: i32) -> (i32, i32) {
    %c0_i32 = arith.constant 0 : i32
    %c0_i32_0 = arith.constant 0 : i32
    %c0_i32_1 = arith.constant 0 : i32
    return %c0_i32, %c0_i32_0 : i32, i32
  }
  func.func @transform_3(%arg0: i32, %arg1: i32) -> (i32, i32) {
    %c0_i32 = arith.constant 0 : i32
    %c0_i32_0 = arith.constant 0 : i32
    return %c0_i32, %arg1 : i32, i32
  }
  func.func @transform_4(%arg0: i32, %arg1: i32) -> (i32, i32) {
    %c0_i32 = arith.constant 0 : i32
    %c0_i32_0 = arith.constant 0 : i32
    return %c0_i32, %arg1 : i32, i32
  }
  func.func @transform_5(%arg0: i32, %arg1: i32) -> (i32, i32) {
    %c0_i32 = arith.constant 0 : i32
    return %arg0, %arg1 : i32, i32
  }
}

</mosaic_0001>

<llo_original>
// kernel: tpu_custom_call.1
$region0: #{tpu_custom_call.1}
  #allocation0 [shape = 'u32[]', space=smem, size = 0x4, offset = 0x4, fixed_abs, tag = 'smem constant byte address 0x4 - core index']
  #allocation1 [shape = 'u32[144,128]{1,0:T(1,128)}', space=vmem, size = 0x12000, scoped, tag = 'internal scratch']
  %s0 = inlined_call_operand.hbm [shape: f32[8,128], index: 0, kind: input, shape index: {}]
  %s1 = inlined_call_operand.hbm [shape: f32[8,128], index: 1, kind: output, shape index: {}]
  %s2 = sld [smem:[#allocation0]]
  $region18: #{tpu_custom_call.1} parent=0
    _
  %s4 = ssub.s32 1, %s2
  %s5 = scalar_select 0, %s4, %s2
  $region1: #{tpu_custom_call.1} parent=0
    #allocation2 [shape = 'u8[4096]{0}', space=vmem, size = 0x1000, scoped, tag = 'input window, operand 0, single buffered']
    #allocation3 [shape = 's32[1]{0}', space=sflag, size = 0x4, scoped, tag = 'scoped memory for tpu_custom_call.1']
    #allocation4 [shape = 's32[1]{0}', space=sflag, size = 0x4, scoped, tag = 'scoped memory for tpu_custom_call.1']
    #allocation5 [shape = 'u8[4096]{0}', space=vmem, size = 0x1000, scoped, tag = 'output window, operand 0, single buffered']
    %6 = vsyncpa [#allocation3], 0
    %7 = vsyncpa [#allocation4], 0
    // Predicated region
    $region2: #{tpu_custom_call.1} parent=1 // pred_check
      _
    $region3: #{tpu_custom_call.1} parent=1 // pred_check_branch
      %9 = sbr.rel (0) target = $region5
    $region4: #{tpu_custom_call.1} parent=1 // pred_region
      %s11 = ssub.s32 128, 128
      %12 = vsyncadd [#allocation3], %s11
      %s14 = sshll.u32 [#allocation2], 4
      %s15 = int_to_ptr.vmem [resolvable:$true] %s14
      %17 = dma.hbm_to_vmem [thread:$0]  %s0, 128, %s15, [#allocation3]
    $region5: #{tpu_custom_call.1} parent=1 // pred_fallthru
      _
    // Predicated region
    $region6: #{tpu_custom_call.1} parent=1 // pred_check
      _
    $region7: #{tpu_custom_call.1} parent=1 // pred_check_branch
      %19 = sbr.rel (0) target = $region9
    $region8: #{tpu_custom_call.1} parent=1 // pred_region
      %20 = dma.done [#allocation3], 128
    $region9: #{tpu_custom_call.1} parent=1 // pred_fallthru
      _
    %v21 = vld [vmem:[#allocation2] sm:$0xff]
    %22 = vst [vmem:[#allocation5] sm:$0xff] %v21
    // Predicated region
    $region10: #{tpu_custom_call.1} parent=1 // pred_check
      _
    $region11: #{tpu_custom_call.1} parent=1 // pred_check_branch
      %24 = sbr.rel (0) target = $region13
    $region12: #{tpu_custom_call.1} parent=1 // pred_region
      %s26 = ssub.s32 128, 128
      %27 = vsyncadd [#allocation4], %s26
      %s29 = sshll.u32 [#allocation5], 4
      %s30 = int_to_ptr.vmem [resolvable:$true] %s29
      %32 = dma.vmem_to_hbm [thread:$0]  %s30, 128, %s1, [#allocation4]
    $region13: #{tpu_custom_call.1} parent=1 // pred_fallthru
      _
    // Predicated region
    $region14: #{tpu_custom_call.1} parent=1 // pred_check
      _
    $region15: #{tpu_custom_call.1} parent=1 // pred_check_branch
      %34 = sbr.rel (0) target = $region17
    $region16: #{tpu_custom_call.1} parent=1 // pred_region
      %35 = dma.done [#allocation4], 128
    $region17: #{tpu_custom_call.1} parent=1 // pred_fallthru
      _
    %36 = vsyncpa [#allocation3], 1
    %37 = vsyncpa [#allocation4], 1

// kernel: tpu_custom_call.1
$region0: #{tpu_custom_call.1}
  #allocation0 [shape = 'u32[]', space=smem, size = 0x4, offset = 0x4, fixed_abs, tag = 'smem constant byte address 0x4 - core index']
  #allocation1 [shape = 'u32[144,128]{1,0:T(1,128)}', space=vmem, size = 0x12000, scoped, tag = 'internal scratch']
  #allocation2 [shape = 'f32[2,256]{1,0:T(2,128)}', space=vmem, size = 0x800, scoped, tag = 'scratch operand']
  %s0 = inlined_call_operand.hbm [shape: f32[2,32], index: 0, kind: input, shape index: {}]
  %s1 = inlined_call_operand.hbm [shape: f32[32,256], index: 1, kind: input, shape index: {}]
  %s2 = inlined_call_operand.vmem [shape: f32[1,256], index: 2, kind: input, shape index: {}]
  %s3 = inlined_call_operand.hbm [shape: f32[256,256], index: 3, kind: input, shape index: {}]
  %s4 = inlined_call_operand.vmem [shape: f32[1,256], index: 4, kind: input, shape index: {}]
  %s5 = inlined_call_operand.hbm [shape: f32[2,256], index: 5, kind: output, shape index: {}]
  %s6 = sld [smem:[#allocation0]]
  $region46: #{tpu_custom_call.1} parent=0
    _
  %s8 = ssub.s32 1, %s6
  %s9 = scalar_select 0, %s8, %s6
  $region1: #{tpu_custom_call.1} parent=0
    #allocation3 [shape = 'u8[1024]{0}', space=vmem, size = 0x400, scoped, tag = 'input window, operand 0, single buffered']
    #allocation4 [shape = 's32[1]{0}', space=sflag, size = 0x4, scoped, tag = 'scoped memory for tpu_custom_call.1']
    #allocation5 [shape = 's32[1]{0}', space=sflag, size = 0x4, scoped, tag = 'scoped memory for tpu_custom_call.1']
    #allocation6 [shape = 'u8[32768]{0}', space=vmem, size = 0x8000, scoped, tag = 'input window, operand 1, single buffered']
    #allocation7 [shape = 's32[1]{0}', space=sflag, size = 0x4, scoped, tag = 'scoped memory for tpu_custom_call.1']
    #allocation8 [shape = 'u8[262144]{0}', space=vmem, size = 0x40000, scoped, tag = 'input window, operand 3, single buffered']
    #allocation9 [shape = 'u8[2048]{0}', space=vmem, size = 0x800, scoped, tag = 'output window, operand 0, single buffered']
    %10 = vsyncpa [#allocation4], 0
    %11 = vsyncpa [#allocation7], 0
    %12 = vsyncpa [#allocation5], 0
    // Predicated region
    $region2: #{tpu_custom_call.1} parent=1 // pred_check
      _
    $region3: #{tpu_custom_call.1} parent=1 // pred_check_branch
      %14 = sbr.rel (0) target = $region5
    $region4: #{tpu_custom_call.1} parent=1 // pred_region
      %s16 = ssub.s32 32, 32
      %17 = vsyncadd [#allocation4], %s16
      %s19 = sshll.u32 [#allocation3], 4
      %s20 = int_to_ptr.vmem [resolvable:$true] %s19
      %22 = dma.hbm_to_vmem [thread:$0]  %s0, 32, %s20, [#allocation4]
    $region5: #{tpu_custom_call.1} parent=1 // pred_fallthru
      _
    // Predicated region
    $region6: #{tpu_custom_call.1} parent=1 // pred_check
      _
    $region7: #{tpu_custom_call.1} parent=1 // pred_check_branch
      %24 = sbr.rel (0) target = $region9
    $region8: #{tpu_custom_call.1} parent=1 // pred_region
      %s26 = ssub.s32 1024, 1024
      %27 = vsyncadd [#allocation7], %s26
      %s28 = sshll.u32 [#allocation6], 4
      %s29 = int_to_ptr.vmem [resolvable:$true] %s28
      %34 = dma.hbm_to_vmem [thread:$0]  %s1, 1024, %s29, [#allocation7], 256, 256, 16
    $region9: #{tpu_custom_call.1} parent=1 // pred_fallthru
      _
    // Predicated region
    $region10: #{tpu_custom_call.1} parent=1 // pred_check
      _
    $region11: #{tpu_custom_call.1} parent=1 // pred_check_branch
      %36 = sbr.rel (0) target = $region13
    $region12: #{tpu_custom_call.1} parent=1 // pred_region
      _
    $region13: #{tpu_custom_call.1} parent=1 // pred_fallthru
      _
    // Predicated region
    $region14: #{tpu_custom_call.1} parent=1 // pred_check
      _
    $region15: #{tpu_custom_call.1} parent=1 // pred_check_branch
      %38 = sbr.rel (0) target = $region17
    $region16: #{tpu_custom_call.1} parent=1 // pred_region
      %s40 = ssub.s32 8192, 8192
      %41 = vsyncadd [#allocation7], %s40
      %s42 = sshll.u32 [#allocation8], 4
      %s43 = int_to_ptr.vmem [resolvable:$true] %s42
      %48 = dma.hbm_to_vmem [thread:$0]  %s3, 8192, %s43, [#allocation7], 256, 256, 16
    $region17: #{tpu_custom_call.1} parent=1 // pred_fallthru
      _
    // Predicated region
    $region18: #{tpu_custom_call.1} parent=1 // pred_check
      _
    $region19: #{tpu_custom_call.1} parent=1 // pred_check_branch
      %50 = sbr.rel (0) target = $region21
    $region20: #{tpu_custom_call.1} parent=1 // pred_region
      _
    $region21: #{tpu_custom_call.1} parent=1 // pred_fallthru
      _
    // Predicated region
    $region22: #{tpu_custom_call.1} parent=1 // pred_check
      _
    $region23: #{tpu_custom_call.1} parent=1 // pred_check_branch
      %52 = sbr.rel (0) target = $region25
    $region24: #{tpu_custom_call.1} parent=1 // pred_region
      %53 = dma.done [#allocation4], 32
    $region25: #{tpu_custom_call.1} parent=1 // pred_fallthru
      _
    // Predicated region
    $region26: #{tpu_custom_call.1} parent=1 // pred_check
      _
    $region27: #{tpu_custom_call.1} parent=1 // pred_check_branch
      %55 = sbr.rel (0) target = $region29
    $region28: #{tpu_custom_call.1} parent=1 // pred_region
      %56 = dma.done [#allocation7], 1024
    $region29: #{tpu_custom_call.1} parent=1 // pred_fallthru
      _
    // Predicated region
    $region30: #{tpu_custom_call.1} parent=1 // pred_check
      _
    $region31: #{tpu_custom_call.1} parent=1 // pred_check_branch
      %58 = sbr.rel (0) target = $region33
    $region32: #{tpu_custom_call.1} parent=1 // pred_region
      %59 = dma.done [#allocation7], 8192
    $region33: #{tpu_custom_call.1} parent=1 // pred_fallthru
      _
    %p60 = scmp.eq.s32.totalorder 0, 0
    // Predicated region
    $region34: #{tpu_custom_call.1} parent=1 // pred_check
      %p61 = pneg %p60
    $region35: #{tpu_custom_call.1} parent=1 // pred_check_branch
      %63 = sbr.rel (%p61) target = $region37
    $region36: #{tpu_custom_call.1} parent=1 // pred_region
      %v64 = vld [vmem:[#allocation3] sm:$0x3]
      %v65 = vld [vmem:[#allocation6] sm:$0xff]
      %v66 = vld [vmem:[#allocation6 + $0x8] sm:$0xff]
      %v67 = vld [vmem:[#allocation6 + $0x10] sm:$0xff]
      %v68 = vld [vmem:[#allocation6 + $0x18] sm:$0xff]
      %v69 = vld [vmem:[#allocation6 + $0x20] sm:$0xff]
      %v70 = vld [vmem:[#allocation6 + $0x28] sm:$0xff]
      %v71 = vld [vmem:[#allocation6 + $0x30] sm:$0xff]
      %v72 = vld [vmem:[#allocation6 + $0x38] sm:$0xff]
      %v73 = vld [vmem:[%s2] sm:$0x3]
      %v75 = vlaneseq
      %v76 = vshrl.u32 %v75, 7
      %v77 = vsub.s32 0, %v76
      %v78 = vrot.slane %v73, %v77
      %v79 = vlaneseq
      %v80 = vshrl.u32 %v79, 7
      %v81 = vsub.s32 1, %v80
      %v82 = vrot.slane %v73, %v81
      %vm85 = vcmask 261120
      %v87 = vsel %vm85, %v64, 0
      %89 = vmatprep.subr.mxu0 0.0
      %90 = vmatpush1.msra.mxu0 0.0
      %91 = vmatprep.subr.mxu0 0.0
      %92 = vmatpush1.msra.mxu0 0.0
      %93 = vmatprep.subr.mxu0 0.0
      %94 = vmatpush1.msra.mxu0 0.0
      %95 = vmatprep.subr.mxu0 0.0
      %96 = vmatpush1.msra.mxu0 0.0
      %97 = vmatprep.subr.mxu0 0.0
      %98 = vmatpush1.msra.mxu0 0.0
      %99 = vmatprep.subr.mxu0 0.0
      %100 = vmatpush1.msra.mxu0 0.0
      %101 = vmatprep.subr.mxu0 0.0
      %102 = vmatpush1.msra.mxu0 0.0
      %103 = vmatprep.subr.mxu0 0.0
      %104 = vmatpush1.msra.mxu0 0.0
      %105 = vmatprep.subr.mxu0 0.0
      %106 = vmatpush1.msra.mxu0 0.0
      %107 = vmatprep.subr.mxu0 0.0
      %108 = vmatpush1.msra.mxu0 0.0
      %109 = vmatprep.subr.mxu0 0.0
      %110 = vmatpush1.msra.mxu0 0.0
      %111 = vmatprep.subr.mxu0 0.0
      %112 = vmatpush1.msra.mxu0 0.0
      %113 = vmatprep.subr.mxu0 %v72
      %114 = vmatpush1.msra.mxu0 %v71
      %115 = vmatprep.subr.mxu0 %v70
      %116 = vmatpush1.msra.mxu0 %v69
      %117 = vmatprep.subr.mxu0 %v68
      %118 = vmatpush1.msra.mxu0 %v67
      %119 = vmatprep.subr.mxu0 %v66
      %120 = vmatpush1.msra.mxu0 %v65
      %121 = vmatprep.subr.mxu0 0.0
      %122 = vmatpush2.msra.mxu0 0.0
      %123 = vmatprep.subr.mxu0 0.0
      %124 = vmatpush2.msra.mxu0 0.0
      %125 = vmatprep.subr.mxu0 0.0
      %126 = vmatpush2.msra.mxu0 0.0
      %127 = vmatprep.subr.mxu0 0.0
      %128 = vmatpush2.msra.mxu0 0.0
      %129 = vmatprep.subr.mxu0 0.0
      %130 = vmatpush2.msra.mxu0 0.0
      %131 = vmatprep.subr.mxu0 0.0
      %132 = vmatpush2.msra.mxu0 0.0
      %133 = vmatprep.subr.mxu0 0.0
      %134 = vmatpush2.msra.mxu0 0.0
      %135 = vmatprep.subr.mxu0 0.0
      %136 = vmatpush2.msra.mxu0 0.0
      %137 = vmatprep.subr.mxu0 0.0
      %138 = vmatpush2.msra.mxu0 0.0
      %139 = vmatprep.subr.mxu0 0.0
      %140 = vmatpush2.msra.mxu0 0.0
      %141 = vmatprep.subr.mxu0 0.0
      %142 = vmatpush2.msra.mxu0 0.0
      %143 = vmatprep.subr.mxu0 0.0
      %144 = vmatpush2.msra.mxu0 0.0
      %145 = vmatprep.subr.mxu0 0.0
      %146 = vmatpush2.msra.mxu0 0.0
      %147 = vmatprep.subr.mxu0 0.0
      %148 = vmatpush2.msra.mxu0 0.0
      %149 = vmatprep.subr.mxu0 0.0
      %150 = vmatpush2.msra.mxu0 0.0
      %151 = vmatprep.subr.mxu0 0.0
      %152 = vmatpush2.msra.mxu0 0.0
      %153 = vmatprep.mubr.f32.mxu0 0.0
      %154 = vmatmul.mubr.f32.gmra.mxu0 %v87
      %v155 = vpop.f32.mrf.mxu0
      %v156 = vadd.f32 %v78, %v155
      %v157 = vpop.f32.mrf.mxu0
      %v158 = vadd.f32 %v82, %v157
      %159 = vdwg.mxu0
      %v160 = vmax.f32 %v156, 0.0
      %v161 = vmax.f32 %v158, 0.0
      %v164 = vcombine.low %v160, %v161
      %v166 = vunpack.c.l.s4 1983009808
      %v167 = vunpack.c.0.s8 %v166
      %v168 = vlaneseq
      %v169 = vshrl.u32 %v168, 7
      %v170 = vsub.s32 %v167, %v169
      %v171 = vrot.slane %v164, %v170
      %173 = vst [vmem:[#allocation2] sm:$0xf] %v171
    $region37: #{tpu_custom_call.1} parent=1 // pred_fallthru
      _
    %v174 = vld [vmem:[#allocation2] sm:$0xf]
    %v175 = vld [vmem:[#allocation8] sm:$0xff]
    %v176 = vld [vmem:[#allocation8 + $0x8] sm:$0xff]
    %v177 = vld [vmem:[#allocation8 + $0x10] sm:$0xff]
    %v178 = vld [vmem:[#allocation8 + $0x18] sm:$0xff]
    %v179 = vld [vmem:[#allocation8 + $0x20] sm:$0xff]
    %v180 = vld [vmem:[#allocation8 + $0x28] sm:$0xff]
    %v181 = vld [vmem:[#allocation8 + $0x30] sm:$0xff]
    %v182 = vld [vmem:[#allocation8 + $0x38] sm:$0xff]
    %v183 = vld [vmem:[#allocation8 + $0x40] sm:$0xff]
    %v184 = vld [vmem:[#allocation8 + $0x48] sm:$0xff]
    %v185 = vld [vmem:[#allocation8 + $0x50] sm:$0xff]
    %v186 = vld [vmem:[#allocation8 + $0x58] sm:$0xff]
    %v187 = vld [vmem:[#allocation8 + $0x60] sm:$0xff]
    %v188 = vld [vmem:[#allocation8 + $0x68] sm:$0xff]
    %v189 = vld [vmem:[#allocation8 + $0x70] sm:$0xff]
    %v190 = vld [vmem:[#allocation8 + $0x78] sm:$0xff]
    %v191 = vld [vmem:[#allocation8 + $0x80] sm:$0xff]
    %v192 = vld [vmem:[#allocation8 + $0x88] sm:$0xff]
    %v193 = vld [vmem:[#allocation8 + $0x90] sm:$0xff]
    %v194 = vld [vmem:[#allocation8 + $0x98] sm:$0xff]
    %v195 = vld [vmem:[#allocation8 + $0xa0] sm:$0xff]
    %v196 = vld [vmem:[#allocation8 + $0xa8] sm:$0xff]
    %v197 = vld [vmem:[#allocation8 + $0xb0] sm:$0xff]
    %v198 = vld [vmem:[#allocation8 + $0xb8] sm:$0xff]
    %v199 = vld [vmem:[#allocation8 + $0xc0] sm:$0xff]
    %v200 = vld [vmem:[#allocation8 + $0xc8] sm:$0xff]
    %v201 = vld [vmem:[#allocation8 + $0xd0] sm:$0xff]
    %v202 = vld [vmem:[#allocation8 + $0xd8] sm:$0xff]
    %v203 = vld [vmem:[#allocation8 + $0xe0] sm:$0xff]
    %v204 = vld [vmem:[#allocation8 + $0xe8] sm:$0xff]
    %v205 = vld [vmem:[#allocation8 + $0xf0] sm:$0xff]
    %v206 = vld [vmem:[#allocation8 + $0xf8] sm:$0xff]
    %v207 = vld [vmem:[#allocation8 + $0x100] sm:$0xff]
    %v208 = vld [vmem:[#allocation8 + $0x108] sm:$0xff]
    %v209 = vld [vmem:[#allocation8 + $0x110] sm:$0xff]
    %v210 = vld [vmem:[#allocation8 + $0x118] sm:$0xff]
    %v211 = vld [vmem:[#allocation8 + $0x120] sm:$0xff]
    %v212 = vld [vmem:[#allocation8 + $0x128] sm:$0xff]
    %v213 = vld [vmem:[#allocation8 + $0x130] sm:$0xff]
    %v214 = vld [vmem:[#allocation8 + $0x138] sm:$0xff]
    %v215 = vld [vmem:[#allocation8 + $0x140] sm:$0xff]
    %v216 = vld [vmem:[#allocation8 + $0x148] sm:$0xff]
    %v217 = vld [vmem:[#allocation8 + $0x150] sm:$0xff]
    %v218 = vld [vmem:[#allocation8 + $0x158] sm:$0xff]
    %v219 = vld [vmem:[#allocation8 + $0x160] sm:$0xff]
    %v220 = vld [vmem:[#allocation8 + $0x168] sm:$0xff]
    %v221 = vld [vmem:[#allocation8 + $0x170] sm:$0xff]
    %v222 = vld [vmem:[#allocation8 + $0x178] sm:$0xff]
    %v223 = vld [vmem:[#allocation8 + $0x180] sm:$0xff]
    %v224 = vld [vmem:[#allocation8 + $0x188] sm:$0xff]
    %v225 = vld [vmem:[#allocation8 + $0x190] sm:$0xff]
    %v226 = vld [vmem:[#allocation8 + $0x198] sm:$0xff]
    %v227 = vld [vmem:[#allocation8 + $0x1a0] sm:$0xff]
    %v228 = vld [vmem:[#allocation8 + $0x1a8] sm:$0xff]
    %v229 = vld [vmem:[#allocation8 + $0x1b0] sm:$0xff]
    %v230 = vld [vmem:[#allocation8 + $0x1b8] sm:$0xff]
    %v231 = vld [vmem:[#allocation8 + $0x1c0] sm:$0xff]
    %v232 = vld [vmem:[#allocation8 + $0x1c8] sm:$0xff]
    %v233 = vld [vmem:[#allocation8 + $0x1d0] sm:$0xff]
    %v234 = vld [vmem:[#allocation8 + $0x1d8] sm:$0xff]
    %v235 = vld [vmem:[#allocation8 + $0x1e0] sm:$0xff]
    %v236 = vld [vmem:[#allocation8 + $0x1e8] sm:$0xff]
    %v237 = vld [vmem:[#allocation8 + $0x1f0] sm:$0xff]
    %v238 = vld [vmem:[#allocation8 + $0x1f8] sm:$0xff]
    %v239 = vld [vmem:[%s4] sm:$0x3]
    %v241 = vlaneseq
    %v242 = vshrl.u32 %v241, 7
    %v243 = vsub.s32 0, %v242
    %v244 = vrot.slane %v239, %v243
    %v245 = vlaneseq
    %v246 = vshrl.u32 %v245, 7
    %v247 = vsub.s32 1, %v246
    %v248 = vrot.slane %v239, %v247
    %v253 = vunpack.c.l.s4 1983009808
    %v254 = vunpack.c.0.s8 %v253
    %v255 = vlaneseq
    %v256 = vshrl.u32 %v255, 7
    %v257 = vsub.s32 %v254, %v256
    %v258 = vrot.slane %v174, %v257
    %v259 = vcombine.high %v258, %v258
    %262 = vmatprep.subr.mxu0 %v206
    %263 = vmatpush1.msra.mxu0 %v205
    %264 = vmatprep.subr.mxu0 %v204
    %265 = vmatpush1.msra.mxu0 %v203
    %266 = vmatprep.subr.mxu0 %v202
    %267 = vmatpush1.msra.mxu0 %v201
    %268 = vmatprep.subr.mxu0 %v200
    %269 = vmatpush1.msra.mxu0 %v199
    %270 = vmatprep.subr.mxu0 %v198
    %271 = vmatpush1.msra.mxu0 %v197
    %272 = vmatprep.subr.mxu0 %v196
    %273 = vmatpush1.msra.mxu0 %v195
    %274 = vmatprep.subr.mxu0 %v194
    %275 = vmatpush1.msra.mxu0 %v193
    %276 = vmatprep.subr.mxu0 %v192
    %277 = vmatpush1.msra.mxu0 %v191
    %278 = vmatprep.subr.mxu0 %v190
    %279 = vmatpush1.msra.mxu0 %v189
    %280 = vmatprep.subr.mxu0 %v188
    %281 = vmatpush1.msra.mxu0 %v187
    %282 = vmatprep.subr.mxu0 %v186
    %283 = vmatpush1.msra.mxu0 %v185
    %284 = vmatprep.subr.mxu0 %v184
    %285 = vmatpush1.msra.mxu0 %v183
    %286 = vmatprep.subr.mxu0 %v182
    %287 = vmatpush1.msra.mxu0 %v181
    %288 = vmatprep.subr.mxu0 %v180
    %289 = vmatpush1.msra.mxu0 %v179
    %290 = vmatprep.subr.mxu0 %v178
    %291 = vmatpush1.msra.mxu0 %v177
    %292 = vmatprep.subr.mxu0 %v176
    %293 = vmatpush1.msra.mxu0 %v175
    %294 = vmatprep.subr.mxu0 %v238
    %295 = vmatpush2.msra.mxu0 %v237
    %296 = vmatprep.subr.mxu0 %v236
    %297 = vmatpush2.msra.mxu0 %v235
    %298 = vmatprep.subr.mxu0 %v234
    %299 = vmatpush2.msra.mxu0 %v233
    %300 = vmatprep.subr.mxu0 %v232
    %301 = vmatpush2.msra.mxu0 %v231
    %302 = vmatprep.subr.mxu0 %v230
    %303 = vmatpush2.msra.mxu0 %v229
    %304 = vmatprep.subr.mxu0 %v228
    %305 = vmatpush2.msra.mxu0 %v227
    %306 = vmatprep.subr.mxu0 %v226
    %307 = vmatpush2.msra.mxu0 %v225
    %308 = vmatprep.subr.mxu0 %v224
    %309 = vmatpush2.msra.mxu0 %v223
    %310 = vmatprep.subr.mxu0 %v222
    %311 = vmatpush2.msra.mxu0 %v221
    %312 = vmatprep.subr.mxu0 %v220
    %313 = vmatpush2.msra.mxu0 %v219
    %314 = vmatprep.subr.mxu0 %v218
    %315 = vmatpush2.msra.mxu0 %v217
    %316 = vmatprep.subr.mxu0 %v216
    %317 = vmatpush2.msra.mxu0 %v215
    %318 = vmatprep.subr.mxu0 %v214
    %319 = vmatpush2.msra.mxu0 %v213
    %320 = vmatprep.subr.mxu0 %v212
    %321 = vmatpush2.msra.mxu0 %v211
    %322 = vmatprep.subr.mxu0 %v210
    %323 = vmatpush2.msra.mxu0 %v209
    %324 = vmatprep.subr.mxu0 %v208
    %325 = vmatpush2.msra.mxu0 %v207
    %326 = vmatprep.mubr.f32.mxu0 %v259
    %327 = vmatmul.mubr.f32.gmra.mxu0 %v258
    %v328 = vpop.f32.mrf.mxu0
    %v329 = vadd.f32 %v244, %v328
    %v330 = vpop.f32.mrf.mxu0
    %v331 = vadd.f32 %v248, %v330
    %332 = vdwg.mxu0
    %v335 = vcombine.low %v329, %v331
    %v337 = vunpack.c.l.s4 1983009808
    %v338 = vunpack.c.0.s8 %v337
    %v339 = vlaneseq
    %v340 = vshrl.u32 %v339, 7
    %v341 = vsub.s32 %v338, %v340
    %v342 = vrot.slane %v335, %v341
    %344 = vst [vmem:[#allocation9] sm:$0xf] %v342
    // Predicated region
    $region38: #{tpu_custom_call.1} parent=1 // pred_check
      _
    $region39: #{tpu_custom_call.1} parent=1 // pred_check_branch
      %346 = sbr.rel (0) target = $region41
    $region40: #{tpu_custom_call.1} parent=1 // pred_region
      %s348 = ssub.s32 64, 64
      %349 = vsyncadd [#allocation5], %s348
      %s351 = sshll.u32 [#allocation9], 4
      %s352 = int_to_ptr.vmem [resolvable:$true] %s351
      %354 = dma.vmem_to_hbm [thread:$0]  %s352, 64, %s5, [#allocation5]
    $region41: #{tpu_custom_call.1} parent=1 // pred_fallthru
      _
    // Predicated region
    $region42: #{tpu_custom_call.1} parent=1 // pred_check
      _
    $region43: #{tpu_custom_call.1} parent=1 // pred_check_branch
      %356 = sbr.rel (0) target = $region45
    $region44: #{tpu_custom_call.1} parent=1 // pred_region
      %357 = dma.done [#allocation5], 64
    $region45: #{tpu_custom_call.1} parent=1 // pred_fallthru
      _
    %358 = vsyncpa [#allocation4], 1
    %359 = vsyncpa [#allocation7], 1
    %360 = vsyncpa [#allocation5], 1

</llo_original>
